<compile_context>
chip_gen: v5e
topology: v5e:2x2
jax: 0.10.0
libtpu: 0.0.40
codegen_flags: <defaults>
</compile_context>

<pallas_src>
import functools

import jax
import jax.numpy as jnp
from jax import lax
from jax.experimental import pallas as pl
from jax.experimental.pallas import tpu as pltpu


# ---------------------------------------------------------------------------
# Hardware / tiling heuristics
# ---------------------------------------------------------------------------

def _vmem_capacity_bytes():
    """Physical VMEM of the local TPU; conservative default if unknown."""
    try:
        cap = getattr(pltpu.get_tpu_info(), "vmem_capacity_bytes", None)
        if cap:
            return int(cap)
    except Exception:
        pass
    return 64 * 1024 * 1024          # v7x-sized (smallest current generation)


def _pick_tk(rows, itemsize, d, cap, fixed_bytes, n_streams, n_buf):
    """Feature-tile width targeting ~4-6 MiB per input block, bounded so all
    pipeline buffers + fixed VMEM stay inside ~45% of physical VMEM and never
    above 48 MiB (v7x has only 64 MiB physical)."""
    budget = min(int(0.45 * cap), 48 * 1024 * 1024)
    avail = max(budget - fixed_bytes, 2 * 1024 * 1024)
    per_block = min(avail // (n_streams * n_buf), 6 * 1024 * 1024)
    per_block = max(per_block, 512 * 1024)
    tk = (per_block // (rows * itemsize)) // 128 * 128
    return max(int(tk), 512)


def _fused_path_fits(bp, itemsize, cap):
    """Can the single-pass kernel (two resident (B, B) Grams) fit VMEM?"""
    budget = min(int(0.45 * cap), 48 * 1024 * 1024)
    fixed = 4 * bp * bp * 4                     # 2 Gram outputs x ~2 buffers
    min_inputs = 2 * 2 * bp * 512 * itemsize    # 2 streams x 2 bufs x min tile
    return fixed + min_inputs <= budget


def _in_spec(block_shape, index_map, n_buf):
    """Input BlockSpec, with deeper pipelining when requested/available."""
    if n_buf > 2:
        try:
            return pl.BlockSpec(block_shape, index_map,
                                pipeline_mode=pl.Buffered(n_buf))
        except TypeError:     # older BlockSpec signature: default buffering
            pass
    return pl.BlockSpec(block_shape, index_map)


# ---------------------------------------------------------------------------
# Main kernel: both Grams in one streaming pass over the features
# ---------------------------------------------------------------------------

def _make_fused_gram_kernel(tk, kh, d_true, ragged):
    """grid = (nc, kh): nc-way split of the feature reduction (parallel axis,
    maps onto v7x's two TensorCores) x kh feature tiles per split.  Partial
    Grams are accumulated directly in the resident output blocks; full tiles
    never execute the ragged mask."""
    dn = (((1,), (1,)), ((), ()))    # contract dim 1 of both operands (no .T)

    def kernel(s_ref, t_ref, gs_ref, gt_ref):
        c = pl.program_id(0)
        k = pl.program_id(1)

        @pl.when(k == 0)
        def _():
            gs_ref[...] = jnp.zeros_like(gs_ref)
            gt_ref[...] = jnp.zeros_like(gt_ref)

        s = s_ref[...]               # (Bp, tk), native dtype
        t = t_ref[...]

        # TODO(synk): confirm in the Mosaic dump that contracting dim 1 of the
        # RHS uses the MXU transposed-operand path (no per-step XLU vxpose).
        def accumulate(sv, tv):
            gs_ref[...] += lax.dot_general(sv, sv, dn,
                                           preferred_element_type=jnp.float32)
            gt_ref[...] += lax.dot_general(tv, tv, dn,
                                           preferred_element_type=jnp.float32)

        if not ragged:
            accumulate(s, t)
        else:
            g = c * kh + k                        # global feature-tile index
            needs_mask = (g + 1) * tk > d_true    # only trailing tile(s)

            @pl.when(jnp.logical_not(needs_mask))
            def _():                              # hot path: no mask work
                accumulate(s, t)

            @pl.when(needs_mask)
            def _():
                col = g * tk + lax.broadcasted_iota(jnp.int32, s.shape, 1)
                valid = col < d_true
                accumulate(jnp.where(valid, s, jnp.zeros_like(s)),
                           jnp.where(valid, t, jnp.zeros_like(t)))

    return kernel


def _fused_grams(s, t, tk, cap):
    """One pallas_call producing both (B, B) Grams (as nc partial sums)."""
    b, d = s.shape
    bp = b
    if b < 8:                                    # sublane-pad tiny batches
        bp = 8
        s = jnp.pad(s, ((0, bp - b), (0, 0)))
        t = jnp.pad(t, ((0, bp - b), (0, 0)))
    itemsize = max(jnp.dtype(s.dtype).itemsize, jnp.dtype(t.dtype).itemsize)
    fixed = 4 * bp * bp * 4                      # 2 Gram outputs x ~2 buffers

    if tk is None:
        tk = _pick_tk(bp, itemsize, d, cap, fixed, n_streams=2, n_buf=3)
    if d <= tk:
        tk = d                                   # single full-extent tile
        ktot = 1
    else:
        tk = max(128, (tk // 128) * 128)
        ktot = -(-d // tk)

    nc = 2 if ktot >= 2 else 1                   # feature split across cores
    kh = -(-ktot // nc)
    ragged = (nc * kh * tk) != d
    n_buf = 3 if kh >= 3 else 2

    if nc * kh == ktot:
        def in_map(c, k):
            return (0, c * kh + k)
    else:                                        # odd ktot: clamp phantom tile
        def in_map(c, k):
            return (0, jnp.minimum(c * kh + k, ktot - 1))

    in_specs = [_in_spec((bp, tk), in_map, n_buf),
                _in_spec((bp, tk), in_map, n_buf)]
    out_specs = [pl.BlockSpec((None, bp, bp), lambda c, k: (c, 0, 0)),
                 pl.BlockSpec((None, bp, bp), lambda c, k: (c, 0, 0))]

    footprint = 2 * n_buf * bp * tk * itemsize + fixed
    vmem_limit = int(max(16 * 1024 * 1024,
                         min(cap, footprint + 8 * 1024 * 1024)))

    gs_p, gt_p = pl.pallas_call(
        _make_fused_gram_kernel(tk, kh, d, ragged),
        out_shape=[jax.ShapeDtypeStruct((nc, bp, bp), jnp.float32),
                   jax.ShapeDtypeStruct((nc, bp, bp), jnp.float32)],
        grid_spec=pltpu.PrefetchScalarGridSpec(
            num_scalar_prefetch=0,
            grid=(nc, kh),
            in_specs=in_specs,
            out_specs=out_specs,
        ),
        compiler_params=pltpu.CompilerParams(
            dimension_semantics=("parallel", "arbitrary"),
            vmem_limit_bytes=vmem_limit,
        ),
    )(s, t)
    return gs_p.sum(axis=0)[:b, :b], gt_p.sum(axis=0)[:b, :b]


# ---------------------------------------------------------------------------
# Fallback kernel: output-tiled Gram (large batch, or differing feature dims)
# ---------------------------------------------------------------------------

def _make_tiled_gram_kernel(tk, ktot, d_true, ragged):
    dn = (((1,), (1,)), ((), ()))

    def kernel(xr_ref, xc_ref, g_ref):
        k = pl.program_id(2)

        @pl.when(k == 0)
        def _():
            g_ref[...] = jnp.zeros_like(g_ref)

        a = xr_ref[...]
        bb = xc_ref[...]

        def accumulate(av, bv):
            g_ref[...] += lax.dot_general(av, bv, dn,
                                          preferred_element_type=jnp.float32)

        if not ragged:
            accumulate(a, bb)
        else:
            @pl.when(k < ktot - 1)
            def _():                              # hot path: no mask work
                accumulate(a, bb)

            @pl.when(k == ktot - 1)
            def _():
                col = k * tk + lax.broadcasted_iota(jnp.int32, a.shape, 1)
                valid = col < d_true
                accumulate(jnp.where(valid, a, jnp.zeros_like(a)),
                           jnp.where(valid, bb, jnp.zeros_like(bb)))

    return kernel


def _tiled_gram(x, tk, cap):
    b, d = x.shape
    if b <= 512:
        tb = max(8, -(-b // 8) * 8)              # single row/col tile
        bp = tb
    else:
        tb = 512
        bp = -(-b // tb) * tb
    if bp != b:
        x = jnp.pad(x, ((0, bp - b), (0, 0)))    # zero rows: sliced off below

    itemsize = jnp.dtype(x.dtype).itemsize
    fixed = 2 * tb * tb * 4                      # output block x ~2 buffers
    if tk is None:
        tk = _pick_tk(tb, itemsize, d, cap, fixed, n_streams=2, n_buf=2)
    if d <= tk:
        tk = d
        ktot = 1
    else:
        tk = max(128, (tk // 128) * 128)
        ktot = -(-d // tk)
    ragged = (ktot * tk) != d

    footprint = 2 * 2 * tb * tk * itemsize + fixed
    vmem_limit = int(max(16 * 1024 * 1024,
                         min(cap, footprint + 8 * 1024 * 1024)))

    g = pl.pallas_call(
        _make_tiled_gram_kernel(tk, ktot, d, ragged),
        out_shape=jax.ShapeDtypeStruct((bp, bp), jnp.float32),
        grid_spec=pltpu.PrefetchScalarGridSpec(
            num_scalar_prefetch=0,
            grid=(bp // tb, bp // tb, ktot),
            in_specs=[pl.BlockSpec((tb, tk), lambda i, j, k: (i, k)),
                      pl.BlockSpec((tb, tk), lambda i, j, k: (j, k))],
            out_specs=pl.BlockSpec((tb, tb), lambda i, j, k: (i, j)),
        ),
        compiler_params=pltpu.CompilerParams(
            dimension_semantics=("parallel", "parallel", "arbitrary"),
            vmem_limit_bytes=vmem_limit,
        ),
    )(x, x)
    return g[:b, :b]


# ---------------------------------------------------------------------------
# Public entry point: SP.forward
# ---------------------------------------------------------------------------

@functools.partial(jax.jit, static_argnames=("reduction", "tk", "force_tiled"))
def sp_loss(fm_s, fm_t, *, reduction="mean", tk=None, force_tiled=False):
    """Pallas implementation of SP.forward(fm_s, fm_t)."""
    b = fm_s.shape[0]
    assert fm_t.shape[0] == b, "batch dims of fm_s / fm_t must match"
    s = fm_s.reshape(b, -1)          # row-major flatten == torch .view(B, -1)
    t = fm_t.reshape(b, -1)

    cap = _vmem_capacity_bytes()
    bp = max(b, 8)
    itemsize = max(jnp.dtype(s.dtype).itemsize, jnp.dtype(t.dtype).itemsize)

    use_tiled = (force_tiled
                 or s.shape[1] != t.shape[1]     # student/teacher dims differ
                 or not _fused_path_fits(bp, itemsize, cap))
    if use_tiled:
        g_s = _tiled_gram(s, tk, cap)
        g_t = _tiled_gram(t, tk, cap)
    else:
        g_s, g_t = _fused_grams(s, t, tk, cap)

    # F.normalize(p=2, dim=1): x / max(||x||_2, 1e-12); then MSE.  This O(B^2)
    # epilogue runs in XLA so the per-core partial Grams combine cheaply.
    def _row_normalize(g):
        n = jnp.sqrt(jnp.sum(g * g, axis=1, keepdims=True))
        return g / jnp.maximum(n, jnp.float32(1e-12))

    diff2 = (_row_normalize(g_s) - _row_normalize(g_t)) ** 2
    if reduction == "mean":
        return jnp.mean(diff2)
    if reduction == "sum":
        return jnp.sum(diff2)
    return diff2                                  # reduction == 'none'


def _sp_ref(fm_s, fm_t):
    """Pure-JAX reference matching the PyTorch module (exact f32 matmul)."""
    b = fm_s.shape[0]
    s = fm_s.reshape(b, -1).astype(jnp.float32)
    t = fm_t.reshape(b, -1).astype(jnp.float32)
    g_s = jnp.dot(s, s.T, precision=lax.Precision.HIGHEST)
    g_t = jnp.dot(t, t.T, precision=lax.Precision.HIGHEST)
    n_s = g_s / jnp.maximum(jnp.linalg.norm(g_s, axis=1, keepdims=True), 1e-12)
    n_t = g_t / jnp.maximum(jnp.linalg.norm(g_t, axis=1, keepdims=True), 1e-12)
    return jnp.mean((n_s - n_t) ** 2)


if __name__ == "__main__":
    key = jax.random.PRNGKey(0)
    k1, k2, k3, k4 = jax.random.split(key, 4)

    def bf16_exact(x):
        # Round test inputs through bf16 so the check is independent of how
        # many MXU passes the f32 matmul uses on a given TPU generation.
        return x.astype(jnp.bfloat16).astype(jnp.float32)

    # Shapes implied by the module's forward: (B, C, H, W).
    fm_s = bf16_exact(jax.random.normal(k1, (2, 4, 16, 16), dtype=jnp.float32))
    fm_t = bf16_exact(jax.random.normal(k2, (2, 4, 16, 16), dtype=jnp.float32))

    loss = jax.block_until_ready(sp_loss(fm_s, fm_t))
    ref = _sp_ref(fm_s, fm_t)
    assert jnp.allclose(loss, ref, rtol=1e-4, atol=1e-7), (loss, ref)

    # Multi-tile path: exercises the 2-way core split, the ragged last tile,
    # the phantom-tile clamp (tk=4096 -> 3 tiles), 3-deep buffering
    # (tk=2048 -> 6 tiles) and the output-tiled fallback.
    fm_s2 = bf16_exact(
        jax.random.normal(k3, (8, 12, 30, 30), dtype=jnp.float32))  # D=10800
    fm_t2 = bf16_exact(
        jax.random.normal(k4, (8, 12, 30, 30), dtype=jnp.float32))
    ref2 = _sp_ref(fm_s2, fm_t2)

    loss2a = jax.block_until_ready(sp_loss(fm_s2, fm_t2, tk=4096))
    loss2b = jax.block_until_ready(sp_loss(fm_s2, fm_t2, tk=2048))
    loss2c = jax.block_until_ready(
        sp_loss(fm_s2, fm_t2, tk=4096, force_tiled=True))
    assert jnp.allclose(loss2a, ref2, rtol=1e-4, atol=1e-7), (loss2a, ref2)
    assert jnp.allclose(loss2b, ref2, rtol=1e-4, atol=1e-7), (loss2b, ref2)
    assert jnp.allclose(loss2c, ref2, rtol=1e-4, atol=1e-7), (loss2c, ref2)
    # Both Pallas paths use the same MXU arithmetic: they agree tightly.
    assert jnp.allclose(loss2a, loss2c, rtol=1e-4, atol=1e-8), (loss2a, loss2c)

    print("KERNEL_OK")
</pallas_src>

<mosaic_0001>
module attributes {stable_mosaic.version = 11 : i64} {
  func.func @kernel(%arg0: i32, %arg1: i32, %arg2: memref<8x1024xf32, #tpu.memory_space<vmem>>, %arg3: memref<8x1024xf32, #tpu.memory_space<vmem>>, %arg4: memref<1x8x8xf32, #tpu.memory_space<vmem>>, %arg5: memref<1x8x8xf32, #tpu.memory_space<vmem>>) attributes {dimension_semantics = [#tpu.dimension_semantics<parallel>, #tpu.dimension_semantics<arbitrary>], iteration_bounds = array<i64: 1, 1>, scalar_prefetch = 0 : i64, scratch_operands = 0 : i64, tpu.core_type = #tpu.core_type<tc>, window_params = [{transform_indices = @transform_0, window_bounds = array<i64: 8, 1024>}, {transform_indices = @transform_1, window_bounds = array<i64: 8, 1024>}, {transform_indices = @transform_2, window_bounds = array<i64: 1, 8, 8>}, {transform_indices = @transform_3, window_bounds = array<i64: 1, 8, 8>}]} {
    %c0_i32 = arith.constant 0 : i32
    %0 = arith.cmpi eq, %arg1, %c0_i32 : i32
    %1 = arith.extui %0 : i1 to i32
    %c0_i32_0 = arith.constant 0 : i32
    %2 = arith.cmpi ne, %1, %c0_i32_0 : i32
    scf.if %2 {
      %cst_17 = arith.constant 0.000000e+00 : f32
      %19 = vector.broadcast %cst_17 : f32 to vector<8x8xf32>
      %c0_18 = arith.constant 0 : index
      %c0_19 = arith.constant 0 : index
      %c0_20 = arith.constant 0 : index
      %20 = vector.load %arg4[%c0_18, %c0_19, %c0_20] : memref<1x8x8xf32, #tpu.memory_space<vmem>>, vector<1x8x8xf32>
      %21 = vector.shape_cast %20 : vector<1x8x8xf32> to vector<8x8xf32>
      %22 = vector.shape_cast %19 : vector<8x8xf32> to vector<1x8x8xf32>
      tpu.vector_store %arg4[%c0_18, %c0_19, %c0_20], %22 {strides = array<i32>} : memref<1x8x8xf32, #tpu.memory_space<vmem>>, vector<1x8x8xf32>,
      %cst_21 = arith.constant 0.000000e+00 : f32
      %23 = vector.broadcast %cst_21 : f32 to vector<8x8xf32>
      %c0_22 = arith.constant 0 : index
      %c0_23 = arith.constant 0 : index
      %c0_24 = arith.constant 0 : index
      %24 = vector.load %arg5[%c0_22, %c0_23, %c0_24] : memref<1x8x8xf32, #tpu.memory_space<vmem>>, vector<1x8x8xf32>
      %25 = vector.shape_cast %24 : vector<1x8x8xf32> to vector<8x8xf32>
      %26 = vector.shape_cast %23 : vector<8x8xf32> to vector<1x8x8xf32>
      tpu.vector_store %arg5[%c0_22, %c0_23, %c0_24], %26 {strides = array<i32>} : memref<1x8x8xf32, #tpu.memory_space<vmem>>, vector<1x8x8xf32>,
    } else {
    }
    %c0 = arith.constant 0 : index
    %c0_1 = arith.constant 0 : index
    %3 = vector.load %arg2[%c0, %c0_1] : memref<8x1024xf32, #tpu.memory_space<vmem>>, vector<8x1024xf32>
    %c0_2 = arith.constant 0 : index
    %c0_3 = arith.constant 0 : index
    %4 = vector.load %arg3[%c0_2, %c0_3] : memref<8x1024xf32, #tpu.memory_space<vmem>>, vector<8x1024xf32>
    %c0_4 = arith.constant 0 : index
    %c0_5 = arith.constant 0 : index
    %c0_6 = arith.constant 0 : index
    %5 = vector.load %arg4[%c0_4, %c0_5, %c0_6] : memref<1x8x8xf32, #tpu.memory_space<vmem>>, vector<1x8x8xf32>
    %6 = vector.shape_cast %5 : vector<1x8x8xf32> to vector<8x8xf32>
    %cst = arith.constant dense<0.000000e+00> : vector<8x8xf32>
    %7 = tpu.matmul %3, %3, %cst {dimension_numbers = #tpu.dot_dimension_numbers<[1], [1], [0], [0], [0, 0, 1, 0], [], []>} : vector<8x1024xf32>, vector<8x1024xf32>, vector<8x8xf32> -> vector<8x8xf32>
    %8 = arith.addf %6, %7 : vector<8x8xf32>
    %c0_7 = arith.constant 0 : index
    %c0_8 = arith.constant 0 : index
    %c0_9 = arith.constant 0 : index
    %9 = vector.load %arg4[%c0_7, %c0_8, %c0_9] : memref<1x8x8xf32, #tpu.memory_space<vmem>>, vector<1x8x8xf32>
    %10 = vector.shape_cast %9 : vector<1x8x8xf32> to vector<8x8xf32>
    %11 = vector.shape_cast %8 : vector<8x8xf32> to vector<1x8x8xf32>
    tpu.vector_store %arg4[%c0_7, %c0_8, %c0_9], %11 {strides = array<i32>} : memref<1x8x8xf32, #tpu.memory_space<vmem>>, vector<1x8x8xf32>,
    %c0_10 = arith.constant 0 : index
    %c0_11 = arith.constant 0 : index
    %c0_12 = arith.constant 0 : index
    %12 = vector.load %arg5[%c0_10, %c0_11, %c0_12] : memref<1x8x8xf32, #tpu.memory_space<vmem>>, vector<1x8x8xf32>
    %13 = vector.shape_cast %12 : vector<1x8x8xf32> to vector<8x8xf32>
    %cst_13 = arith.constant dense<0.000000e+00> : vector<8x8xf32>
    %14 = tpu.matmul %4, %4, %cst_13 {dimension_numbers = #tpu.dot_dimension_numbers<[1], [1], [0], [0], [0, 0, 1, 0], [], []>} : vector<8x1024xf32>, vector<8x1024xf32>, vector<8x8xf32> -> vector<8x8xf32>
    %15 = arith.addf %13, %14 : vector<8x8xf32>
    %c0_14 = arith.constant 0 : index
    %c0_15 = arith.constant 0 : index
    %c0_16 = arith.constant 0 : index
    %16 = vector.load %arg5[%c0_14, %c0_15, %c0_16] : memref<1x8x8xf32, #tpu.memory_space<vmem>>, vector<1x8x8xf32>
    %17 = vector.shape_cast %16 : vector<1x8x8xf32> to vector<8x8xf32>
    %18 = vector.shape_cast %15 : vector<8x8xf32> to vector<1x8x8xf32>
    tpu.vector_store %arg5[%c0_14, %c0_15, %c0_16], %18 {strides = array<i32>} : memref<1x8x8xf32, #tpu.memory_space<vmem>>, vector<1x8x8xf32>,
    return
  }
  func.func @transform_0(%arg0: i32, %arg1: i32) -> (i32, i32) {
    %c1_i32 = arith.constant 1 : i32
    %0 = arith.muli %arg0, %c1_i32 : i32
    %1 = arith.addi %0, %arg1 : i32
    %c0_i32 = arith.constant 0 : i32
    %c0_i32_0 = arith.constant 0 : i32
    return %c0_i32, %1 : i32, i32
  }
  func.func @transform_1(%arg0: i32, %arg1: i32) -> (i32, i32) {
    %c1_i32 = arith.constant 1 : i32
    %0 = arith.muli %arg0, %c1_i32 : i32
    %1 = arith.addi %0, %arg1 : i32
    %c0_i32 = arith.constant 0 : i32
    %c0_i32_0 = arith.constant 0 : i32
    return %c0_i32, %1 : i32, i32
  }
  func.func @transform_2(%arg0: i32, %arg1: i32) -> (i32, i32, i32) {
    %c0_i32 = arith.constant 0 : i32
    %c0_i32_0 = arith.constant 0 : i32
    %c0_i32_1 = arith.constant 0 : i32
    return %arg0, %c0_i32, %c0_i32_0 : i32, i32, i32
  }
  func.func @transform_3(%arg0: i32, %arg1: i32) -> (i32, i32, i32) {
    %c0_i32 = arith.constant 0 : i32
    %c0_i32_0 = arith.constant 0 : i32
    %c0_i32_1 = arith.constant 0 : i32
    return %arg0, %c0_i32, %c0_i32_0 : i32, i32, i32
  }
}

</mosaic_0001>

<llo_original>
// kernel: sp_loss.1
$region0: #{sp_loss.1}
  #allocation0 [shape = 'u32[]', space=smem, size = 0x4, offset = 0x4, fixed_abs, tag = 'smem constant byte address 0x4 - core index']
  #allocation1 [shape = 'u32[72,128]{1,0:T(1,128)}', space=vmem, size = 0x9000, scoped, tag = 'internal scratch']
  %s0 = inlined_call_operand.vmem [shape: f32[8,1024], index: 0, kind: input, shape index: {}]
  %s1 = inlined_call_operand.vmem [shape: f32[8,1024], index: 1, kind: input, shape index: {}]
  %s2 = inlined_call_operand.vmem [shape: f32[1,8,8], index: 2, kind: output, shape index: {0}]
  %s3 = inlined_call_operand.vmem [shape: f32[1,8,8], index: 3, kind: output, shape index: {1}]
  %4 = xla_tuple %s2, %s3
  %s5 = sld [smem:[#allocation0]]
  $region30: #{sp_loss.1} parent=0
    _
  %s7 = ssub.s32 1, %s5
  %s8 = scalar_select 0, %s7, %s5
  // Predicated region
  $region2: #{sp_loss.1} parent=0 // pred_check
    _
  $region3: #{sp_loss.1} parent=0 // pred_check_branch
    %10 = sbr.rel (0) target = $region5
  $region4: #{sp_loss.1} parent=0 // pred_region
    %s11 = sadd.s32 0, 0
    %s12 = smul.u32 8, %s11
    %p13 = scmp.lt.s32.totalorder %s12, 7
    %s14 = scalar_select %p13, %s12, 7
    %s15 = smul.addr %s14, 8
    %s16 = scalar_lea.vmem %s0, %s15
    %s17 = sadd.s32 0, 0
    %s18 = smul.u32 8, %s17
  $region5: #{sp_loss.1} parent=0 // pred_fallthru
    _
  // Predicated region
  $region6: #{sp_loss.1} parent=0 // pred_check
    _
  $region7: #{sp_loss.1} parent=0 // pred_check_branch
    %20 = sbr.rel (0) target = $region9
  $region8: #{sp_loss.1} parent=0 // pred_region
    %s21 = sadd.s32 0, 0
    %s22 = smul.u32 8, %s21
    %p23 = scmp.lt.s32.totalorder %s22, 7
    %s24 = scalar_select %p23, %s22, 7
    %s25 = smul.addr %s24, 8
    %s26 = scalar_lea.vmem %s1, %s25
    %s27 = sadd.s32 0, 0
    %s28 = smul.u32 8, %s27
  $region9: #{sp_loss.1} parent=0 // pred_fallthru
    _
  %s29 = sadd.s32 0, 0
  %s30 = smul.u32 8, %s29
  %p31 = scmp.lt.s32.totalorder %s30, 7
  %s32 = scalar_select %p31, %s30, 7
  %s33 = smul.addr %s32, 8
  %s34 = scalar_lea.vmem %s0, %s33
  %s35 = sadd.s32 0, 0
  %s36 = smul.u32 8, %s35
  %p37 = scmp.lt.s32.totalorder %s36, 7
  %s38 = scalar_select %p37, %s36, 7
  %s39 = smul.addr %s38, 8
  %s40 = scalar_lea.vmem %s1, %s39
  %s41 = sadd.s32 0, 0
  %s42 = smul.u32 8, %s41
  %p43 = scmp.lt.s32.totalorder %s42, 7
  %s44 = scalar_select %p43, %s42, 7
  %s45 = smul.addr %s44, 8
  %s46 = scalar_lea.vmem %s0, %s45
  %s47 = sadd.s32 0, 0
  %s48 = smul.u32 8, %s47
  %s49 = sadd.s32 0, 0
  %s50 = smul.u32 8, %s49
  %p51 = scmp.lt.s32.totalorder %s50, 7
  %s52 = scalar_select %p51, %s50, 7
  %s53 = smul.addr %s52, 8
  %s54 = scalar_lea.vmem %s1, %s53
  %s55 = sadd.s32 0, 0
  %s56 = smul.u32 8, %s55
  %p57 = scmp.eq.s32.totalorder 0, 0
  // Predicated region
  $region10: #{sp_loss.1} parent=0 // pred_check
    %p58 = pneg %p57
  $region11: #{sp_loss.1} parent=0 // pred_check_branch
    %60 = sbr.rel (%p58) target = $region13
  $region12: #{sp_loss.1} parent=0 // pred_region
    %vm61 = vcmask 64512
    %62 = vst.msk [vmem:[%s2] sm:$0xff] %vm61, 0.0
    %63 = vst.msk [vmem:[%s3] sm:$0xff] %vm61, 0.0
  $region13: #{sp_loss.1} parent=0 // pred_fallthru
    _
  %v64 = vld [vmem:[%s46] sm:$0xff]
  %v65 = vld [vmem:[%s46 + $0x8] sm:$0xff]
  %v66 = vld [vmem:[%s46 + $0x10] sm:$0xff]
  %v67 = vld [vmem:[%s46 + $0x18] sm:$0xff]
  %v68 = vld [vmem:[%s46 + $0x20] sm:$0xff]
  %v69 = vld [vmem:[%s46 + $0x28] sm:$0xff]
  %v70 = vld [vmem:[%s46 + $0x30] sm:$0xff]
  %v71 = vld [vmem:[%s46 + $0x38] sm:$0xff]
  %v72 = vld [vmem:[%s54] sm:$0xff]
  %v73 = vld [vmem:[%s54 + $0x8] sm:$0xff]
  %v74 = vld [vmem:[%s54 + $0x10] sm:$0xff]
  %v75 = vld [vmem:[%s54 + $0x18] sm:$0xff]
  %v76 = vld [vmem:[%s54 + $0x20] sm:$0xff]
  %v77 = vld [vmem:[%s54 + $0x28] sm:$0xff]
  %v78 = vld [vmem:[%s54 + $0x30] sm:$0xff]
  %v79 = vld [vmem:[%s54 + $0x38] sm:$0xff]
  %v80 = vld [vmem:[%s2] sm:$0xff]
  %81 = vmatpush.xpose.msra.mxu0 0.0
  %82 = vmatpush.xpose.msra.mxu0 0.0
  %83 = vmatpush.xpose.msra.mxu0 0.0
  %84 = vmatpush.xpose.msra.mxu0 0.0
  %85 = vmatpush.xpose.msra.mxu0 0.0
  %86 = vmatpush.xpose.msra.mxu0 0.0
  %87 = vmatpush.xpose.msra.mxu0 0.0
  %88 = vmatpush.xpose.msra.mxu0 0.0
  %89 = vmatpush.xpose.msra.mxu0 0.0
  %90 = vmatpush.xpose.msra.mxu0 0.0
  %91 = vmatpush.xpose.msra.mxu0 0.0
  %92 = vmatpush.xpose.msra.mxu0 0.0
  %93 = vmatpush.xpose.msra.mxu0 0.0
  %94 = vmatpush.xpose.msra.mxu0 0.0
  %95 = vmatpush.xpose.msra.mxu0 0.0
  %96 = vmatpush.xpose.msra.mxu0 %v64
  %97 = vmatmul.f32.gmra.mxu0 %v64
  %v98 = vpop.f32.mrf.mxu0
  %v99 = vadd.f32 0.0, %v98
  %100 = vdwg.mxu0
  %101 = vmatpush.xpose.msra.mxu0 0.0
  %102 = vmatpush.xpose.msra.mxu0 0.0
  %103 = vmatpush.xpose.msra.mxu0 0.0
  %104 = vmatpush.xpose.msra.mxu0 0.0
  %105 = vmatpush.xpose.msra.mxu0 0.0
  %106 = vmatpush.xpose.msra.mxu0 0.0
  %107 = vmatpush.xpose.msra.mxu0 0.0
  %108 = vmatpush.xpose.msra.mxu0 0.0
  %109 = vmatpush.xpose.msra.mxu0 0.0
  %110 = vmatpush.xpose.msra.mxu0 0.0
  %111 = vmatpush.xpose.msra.mxu0 0.0
  %112 = vmatpush.xpose.msra.mxu0 0.0
  %113 = vmatpush.xpose.msra.mxu0 0.0
  %114 = vmatpush.xpose.msra.mxu0 0.0
  %115 = vmatpush.xpose.msra.mxu0 0.0
  %116 = vmatpush.xpose.msra.mxu0 %v65
  %117 = vmatmul.f32.gmra.mxu0 %v65
  %v118 = vpop.f32.mrf.mxu0
  %v119 = vadd.f32 %v99, %v118
  %120 = vdwg.mxu0
  %121 = vmatpush.xpose.msra.mxu0 0.0
  %122 = vmatpush.xpose.msra.mxu0 0.0
  %123 = vmatpush.xpose.msra.mxu0 0.0
  %124 = vmatpush.xpose.msra.mxu0 0.0
  %125 = vmatpush.xpose.msra.mxu0 0.0
  %126 = vmatpush.xpose.msra.mxu0 0.0
  %127 = vmatpush.xpose.msra.mxu0 0.0
  %128 = vmatpush.xpose.msra.mxu0 0.0
  %129 = vmatpush.xpose.msra.mxu0 0.0
  %130 = vmatpush.xpose.msra.mxu0 0.0
  %131 = vmatpush.xpose.msra.mxu0 0.0
  %132 = vmatpush.xpose.msra.mxu0 0.0
  %133 = vmatpush.xpose.msra.mxu0 0.0
  %134 = vmatpush.xpose.msra.mxu0 0.0
  %135 = vmatpush.xpose.msra.mxu0 0.0
  %136 = vmatpush.xpose.msra.mxu0 %v66
  %137 = vmatmul.f32.gmra.mxu0 %v66
  %v138 = vpop.f32.mrf.mxu0
  %v139 = vadd.f32 %v119, %v138
  %140 = vdwg.mxu0
  %141 = vmatpush.xpose.msra.mxu0 0.0
  %142 = vmatpush.xpose.msra.mxu0 0.0
  %143 = vmatpush.xpose.msra.mxu0 0.0
  %144 = vmatpush.xpose.msra.mxu0 0.0
  %145 = vmatpush.xpose.msra.mxu0 0.0
  %146 = vmatpush.xpose.msra.mxu0 0.0
  %147 = vmatpush.xpose.msra.mxu0 0.0
  %148 = vmatpush.xpose.msra.mxu0 0.0
  %149 = vmatpush.xpose.msra.mxu0 0.0
  %150 = vmatpush.xpose.msra.mxu0 0.0
  %151 = vmatpush.xpose.msra.mxu0 0.0
  %152 = vmatpush.xpose.msra.mxu0 0.0
  %153 = vmatpush.xpose.msra.mxu0 0.0
  %154 = vmatpush.xpose.msra.mxu0 0.0
  %155 = vmatpush.xpose.msra.mxu0 0.0
  %156 = vmatpush.xpose.msra.mxu0 %v67
  %157 = vmatmul.f32.gmra.mxu0 %v67
  %v158 = vpop.f32.mrf.mxu0
  %v159 = vadd.f32 %v139, %v158
  %160 = vdwg.mxu0
  %161 = vmatpush.xpose.msra.mxu0 0.0
  %162 = vmatpush.xpose.msra.mxu0 0.0
  %163 = vmatpush.xpose.msra.mxu0 0.0
  %164 = vmatpush.xpose.msra.mxu0 0.0
  %165 = vmatpush.xpose.msra.mxu0 0.0
  %166 = vmatpush.xpose.msra.mxu0 0.0
  %167 = vmatpush.xpose.msra.mxu0 0.0
  %168 = vmatpush.xpose.msra.mxu0 0.0
  %169 = vmatpush.xpose.msra.mxu0 0.0
  %170 = vmatpush.xpose.msra.mxu0 0.0
  %171 = vmatpush.xpose.msra.mxu0 0.0
  %172 = vmatpush.xpose.msra.mxu0 0.0
  %173 = vmatpush.xpose.msra.mxu0 0.0
  %174 = vmatpush.xpose.msra.mxu0 0.0
  %175 = vmatpush.xpose.msra.mxu0 0.0
  %176 = vmatpush.xpose.msra.mxu0 %v68
  %177 = vmatmul.f32.gmra.mxu0 %v68
  %v178 = vpop.f32.mrf.mxu0
  %v179 = vadd.f32 %v159, %v178
  %180 = vdwg.mxu0
  %181 = vmatpush.xpose.msra.mxu0 0.0
  %182 = vmatpush.xpose.msra.mxu0 0.0
  %183 = vmatpush.xpose.msra.mxu0 0.0
  %184 = vmatpush.xpose.msra.mxu0 0.0
  %185 = vmatpush.xpose.msra.mxu0 0.0
  %186 = vmatpush.xpose.msra.mxu0 0.0
  %187 = vmatpush.xpose.msra.mxu0 0.0
  %188 = vmatpush.xpose.msra.mxu0 0.0
  %189 = vmatpush.xpose.msra.mxu0 0.0
  %190 = vmatpush.xpose.msra.mxu0 0.0
  %191 = vmatpush.xpose.msra.mxu0 0.0
  %192 = vmatpush.xpose.msra.mxu0 0.0
  %193 = vmatpush.xpose.msra.mxu0 0.0
  %194 = vmatpush.xpose.msra.mxu0 0.0
  %195 = vmatpush.xpose.msra.mxu0 0.0
  %196 = vmatpush.xpose.msra.mxu0 %v69
  %197 = vmatmul.f32.gmra.mxu0 %v69
  %v198 = vpop.f32.mrf.mxu0
  %v199 = vadd.f32 %v179, %v198
  %200 = vdwg.mxu0
  %201 = vmatpush.xpose.msra.mxu0 0.0
  %202 = vmatpush.xpose.msra.mxu0 0.0
  %203 = vmatpush.xpose.msra.mxu0 0.0
  %204 = vmatpush.xpose.msra.mxu0 0.0
  %205 = vmatpush.xpose.msra.mxu0 0.0
  %206 = vmatpush.xpose.msra.mxu0 0.0
  %207 = vmatpush.xpose.msra.mxu0 0.0
  %208 = vmatpush.xpose.msra.mxu0 0.0
  %209 = vmatpush.xpose.msra.mxu0 0.0
  %210 = vmatpush.xpose.msra.mxu0 0.0
  %211 = vmatpush.xpose.msra.mxu0 0.0
  %212 = vmatpush.xpose.msra.mxu0 0.0
  %213 = vmatpush.xpose.msra.mxu0 0.0
  %214 = vmatpush.xpose.msra.mxu0 0.0
  %215 = vmatpush.xpose.msra.mxu0 0.0
  %216 = vmatpush.xpose.msra.mxu0 %v70
  %217 = vmatmul.f32.gmra.mxu0 %v70
  %v218 = vpop.f32.mrf.mxu0
  %v219 = vadd.f32 %v199, %v218
  %220 = vdwg.mxu0
  %221 = vmatpush.xpose.msra.mxu0 0.0
  %222 = vmatpush.xpose.msra.mxu0 0.0
  %223 = vmatpush.xpose.msra.mxu0 0.0
  %224 = vmatpush.xpose.msra.mxu0 0.0
  %225 = vmatpush.xpose.msra.mxu0 0.0
  %226 = vmatpush.xpose.msra.mxu0 0.0
  %227 = vmatpush.xpose.msra.mxu0 0.0
  %228 = vmatpush.xpose.msra.mxu0 0.0
  %229 = vmatpush.xpose.msra.mxu0 0.0
  %230 = vmatpush.xpose.msra.mxu0 0.0
  %231 = vmatpush.xpose.msra.mxu0 0.0
  %232 = vmatpush.xpose.msra.mxu0 0.0
  %233 = vmatpush.xpose.msra.mxu0 0.0
  %234 = vmatpush.xpose.msra.mxu0 0.0
  %235 = vmatpush.xpose.msra.mxu0 0.0
  %236 = vmatpush.xpose.msra.mxu0 %v71
  %237 = vmatmul.f32.gmra.mxu0 %v71
  %v238 = vpop.f32.mrf.mxu0
  %v239 = vadd.f32 %v219, %v238
  %240 = vdwg.mxu0
  %v241 = vadd.f32 %v80, %v239
  %vm242 = vcmask 64512
  %243 = vst.msk [vmem:[%s2] sm:$0xff] %vm242, %v241
  %v244 = vld [vmem:[%s3] sm:$0xff]
  %245 = vmatpush.xpose.msra.mxu0 0.0
  %246 = vmatpush.xpose.msra.mxu0 0.0
  %247 = vmatpush.xpose.msra.mxu0 0.0
  %248 = vmatpush.xpose.msra.mxu0 0.0
  %249 = vmatpush.xpose.msra.mxu0 0.0
  %250 = vmatpush.xpose.msra.mxu0 0.0
  %251 = vmatpush.xpose.msra.mxu0 0.0
  %252 = vmatpush.xpose.msra.mxu0 0.0
  %253 = vmatpush.xpose.msra.mxu0 0.0
  %254 = vmatpush.xpose.msra.mxu0 0.0
  %255 = vmatpush.xpose.msra.mxu0 0.0
  %256 = vmatpush.xpose.msra.mxu0 0.0
  %257 = vmatpush.xpose.msra.mxu0 0.0
  %258 = vmatpush.xpose.msra.mxu0 0.0
  %259 = vmatpush.xpose.msra.mxu0 0.0
  %260 = vmatpush.xpose.msra.mxu0 %v72
  %261 = vmatmul.f32.gmra.mxu0 %v72
  %v262 = vpop.f32.mrf.mxu0
  %v263 = vadd.f32 0.0, %v262
  %264 = vdwg.mxu0
  %265 = vmatpush.xpose.msra.mxu0 0.0
  %266 = vmatpush.xpose.msra.mxu0 0.0
  %267 = vmatpush.xpose.msra.mxu0 0.0
  %268 = vmatpush.xpose.msra.mxu0 0.0
  %269 = vmatpush.xpose.msra.mxu0 0.0
  %270 = vmatpush.xpose.msra.mxu0 0.0
  %271 = vmatpush.xpose.msra.mxu0 0.0
  %272 = vmatpush.xpose.msra.mxu0 0.0
  %273 = vmatpush.xpose.msra.mxu0 0.0
  %274 = vmatpush.xpose.msra.mxu0 0.0
  %275 = vmatpush.xpose.msra.mxu0 0.0
  %276 = vmatpush.xpose.msra.mxu0 0.0
  %277 = vmatpush.xpose.msra.mxu0 0.0
  %278 = vmatpush.xpose.msra.mxu0 0.0
  %279 = vmatpush.xpose.msra.mxu0 0.0
  %280 = vmatpush.xpose.msra.mxu0 %v73
  %281 = vmatmul.f32.gmra.mxu0 %v73
  %v282 = vpop.f32.mrf.mxu0
  %v283 = vadd.f32 %v263, %v282
  %284 = vdwg.mxu0
  %285 = vmatpush.xpose.msra.mxu0 0.0
  %286 = vmatpush.xpose.msra.mxu0 0.0
  %287 = vmatpush.xpose.msra.mxu0 0.0
  %288 = vmatpush.xpose.msra.mxu0 0.0
  %289 = vmatpush.xpose.msra.mxu0 0.0
  %290 = vmatpush.xpose.msra.mxu0 0.0
  %291 = vmatpush.xpose.msra.mxu0 0.0
  %292 = vmatpush.xpose.msra.mxu0 0.0
  %293 = vmatpush.xpose.msra.mxu0 0.0
  %294 = vmatpush.xpose.msra.mxu0 0.0
  %295 = vmatpush.xpose.msra.mxu0 0.0
  %296 = vmatpush.xpose.msra.mxu0 0.0
  %297 = vmatpush.xpose.msra.mxu0 0.0
  %298 = vmatpush.xpose.msra.mxu0 0.0
  %299 = vmatpush.xpose.msra.mxu0 0.0
  %300 = vmatpush.xpose.msra.mxu0 %v74
  %301 = vmatmul.f32.gmra.mxu0 %v74
  %v302 = vpop.f32.mrf.mxu0
  %v303 = vadd.f32 %v283, %v302
  %304 = vdwg.mxu0
  %305 = vmatpush.xpose.msra.mxu0 0.0
  %306 = vmatpush.xpose.msra.mxu0 0.0
  %307 = vmatpush.xpose.msra.mxu0 0.0
  %308 = vmatpush.xpose.msra.mxu0 0.0
  %309 = vmatpush.xpose.msra.mxu0 0.0
  %310 = vmatpush.xpose.msra.mxu0 0.0
  %311 = vmatpush.xpose.msra.mxu0 0.0
  %312 = vmatpush.xpose.msra.mxu0 0.0
  %313 = vmatpush.xpose.msra.mxu0 0.0
  %314 = vmatpush.xpose.msra.mxu0 0.0
  %315 = vmatpush.xpose.msra.mxu0 0.0
  %316 = vmatpush.xpose.msra.mxu0 0.0
  %317 = vmatpush.xpose.msra.mxu0 0.0
  %318 = vmatpush.xpose.msra.mxu0 0.0
  %319 = vmatpush.xpose.msra.mxu0 0.0
  %320 = vmatpush.xpose.msra.mxu0 %v75
  %321 = vmatmul.f32.gmra.mxu0 %v75
  %v322 = vpop.f32.mrf.mxu0
  %v323 = vadd.f32 %v303, %v322
  %324 = vdwg.mxu0
  %325 = vmatpush.xpose.msra.mxu0 0.0
  %326 = vmatpush.xpose.msra.mxu0 0.0
  %327 = vmatpush.xpose.msra.mxu0 0.0
  %328 = vmatpush.xpose.msra.mxu0 0.0
  %329 = vmatpush.xpose.msra.mxu0 0.0
  %330 = vmatpush.xpose.msra.mxu0 0.0
  %331 = vmatpush.xpose.msra.mxu0 0.0
  %332 = vmatpush.xpose.msra.mxu0 0.0
  %333 = vmatpush.xpose.msra.mxu0 0.0
  %334 = vmatpush.xpose.msra.mxu0 0.0
  %335 = vmatpush.xpose.msra.mxu0 0.0
  %336 = vmatpush.xpose.msra.mxu0 0.0
  %337 = vmatpush.xpose.msra.mxu0 0.0
  %338 = vmatpush.xpose.msra.mxu0 0.0
  %339 = vmatpush.xpose.msra.mxu0 0.0
  %340 = vmatpush.xpose.msra.mxu0 %v76
  %341 = vmatmul.f32.gmra.mxu0 %v76
  %v342 = vpop.f32.mrf.mxu0
  %v343 = vadd.f32 %v323, %v342
  %344 = vdwg.mxu0
  %345 = vmatpush.xpose.msra.mxu0 0.0
  %346 = vmatpush.xpose.msra.mxu0 0.0
  %347 = vmatpush.xpose.msra.mxu0 0.0
  %348 = vmatpush.xpose.msra.mxu0 0.0
  %349 = vmatpush.xpose.msra.mxu0 0.0
  %350 = vmatpush.xpose.msra.mxu0 0.0
  %351 = vmatpush.xpose.msra.mxu0 0.0
  %352 = vmatpush.xpose.msra.mxu0 0.0
  %353 = vmatpush.xpose.msra.mxu0 0.0
  %354 = vmatpush.xpose.msra.mxu0 0.0
  %355 = vmatpush.xpose.msra.mxu0 0.0
  %356 = vmatpush.xpose.msra.mxu0 0.0
  %357 = vmatpush.xpose.msra.mxu0 0.0
  %358 = vmatpush.xpose.msra.mxu0 0.0
  %359 = vmatpush.xpose.msra.mxu0 0.0
  %360 = vmatpush.xpose.msra.mxu0 %v77
  %361 = vmatmul.f32.gmra.mxu0 %v77
  %v362 = vpop.f32.mrf.mxu0
  %v363 = vadd.f32 %v343, %v362
  %364 = vdwg.mxu0
  %365 = vmatpush.xpose.msra.mxu0 0.0
  %366 = vmatpush.xpose.msra.mxu0 0.0
  %367 = vmatpush.xpose.msra.mxu0 0.0
  %368 = vmatpush.xpose.msra.mxu0 0.0
  %369 = vmatpush.xpose.msra.mxu0 0.0
  %370 = vmatpush.xpose.msra.mxu0 0.0
  %371 = vmatpush.xpose.msra.mxu0 0.0
  %372 = vmatpush.xpose.msra.mxu0 0.0
  %373 = vmatpush.xpose.msra.mxu0 0.0
  %374 = vmatpush.xpose.msra.mxu0 0.0
  %375 = vmatpush.xpose.msra.mxu0 0.0
  %376 = vmatpush.xpose.msra.mxu0 0.0
  %377 = vmatpush.xpose.msra.mxu0 0.0
  %378 = vmatpush.xpose.msra.mxu0 0.0
  %379 = vmatpush.xpose.msra.mxu0 0.0
  %380 = vmatpush.xpose.msra.mxu0 %v78
  %381 = vmatmul.f32.gmra.mxu0 %v78
  %v382 = vpop.f32.mrf.mxu0
  %v383 = vadd.f32 %v363, %v382
  %384 = vdwg.mxu0
  %385 = vmatpush.xpose.msra.mxu0 0.0
  %386 = vmatpush.xpose.msra.mxu0 0.0
  %387 = vmatpush.xpose.msra.mxu0 0.0
  %388 = vmatpush.xpose.msra.mxu0 0.0
  %389 = vmatpush.xpose.msra.mxu0 0.0
  %390 = vmatpush.xpose.msra.mxu0 0.0
  %391 = vmatpush.xpose.msra.mxu0 0.0
  %392 = vmatpush.xpose.msra.mxu0 0.0
  %393 = vmatpush.xpose.msra.mxu0 0.0
  %394 = vmatpush.xpose.msra.mxu0 0.0
  %395 = vmatpush.xpose.msra.mxu0 0.0
  %396 = vmatpush.xpose.msra.mxu0 0.0
  %397 = vmatpush.xpose.msra.mxu0 0.0
  %398 = vmatpush.xpose.msra.mxu0 0.0
  %399 = vmatpush.xpose.msra.mxu0 0.0
  %400 = vmatpush.xpose.msra.mxu0 %v79
  %401 = vmatmul.f32.gmra.mxu0 %v79
  %v402 = vpop.f32.mrf.mxu0
  %v403 = vadd.f32 %v383, %v402
  %404 = vdwg.mxu0
  %v405 = vadd.f32 %v244, %v403
  %406 = vst.msk [vmem:[%s3] sm:$0xff] %vm242, %v405
  // Predicated region
  $region14: #{sp_loss.1} parent=0 // pred_check
    _
  $region15: #{sp_loss.1} parent=0 // pred_check_branch
    %408 = sbr.rel (0) target = $region17
  $region16: #{sp_loss.1} parent=0 // pred_region
    _
  $region17: #{sp_loss.1} parent=0 // pred_fallthru
    _
  // Predicated region
  $region18: #{sp_loss.1} parent=0 // pred_check
    _
  $region19: #{sp_loss.1} parent=0 // pred_check_branch
    %410 = sbr.rel (0) target = $region21
  $region20: #{sp_loss.1} parent=0 // pred_region
    _
  $region21: #{sp_loss.1} parent=0 // pred_fallthru
    _
  // Predicated region
  $region22: #{sp_loss.1} parent=0 // pred_check
    _
  $region23: #{sp_loss.1} parent=0 // pred_check_branch
    %412 = sbr.rel (0) target = $region25
  $region24: #{sp_loss.1} parent=0 // pred_region
    _
  $region25: #{sp_loss.1} parent=0 // pred_fallthru
    _
  // Predicated region
  $region26: #{sp_loss.1} parent=0 // pred_check
    _
  $region27: #{sp_loss.1} parent=0 // pred_check_branch
    %414 = sbr.rel (0) target = $region29
  $region28: #{sp_loss.1} parent=0 // pred_region
    _
  $region29: #{sp_loss.1} parent=0 // pred_fallthru
    _

</llo_original>
